<compile_context>
chip_gen: v7x
topology: tpu7x:2x2x1
jax: 0.10.0
libtpu: 0.0.40
codegen_flags: <defaults>
</compile_context>

<pallas_src>
import math

import jax
import jax.numpy as jnp
from jax import lax
from jax.experimental import pallas as pl
from jax.experimental.pallas import tpu as pltpu

NEG_INF = -1000000000.0  # matches the reference masked_fill_ value


def _mha_attn_kernel(maskz_ref, q_ref, k_ref, v_ref, wo_ref, o_ref,
                     m_sc, l_sc, ctx_sc, out_sc):
    """Grid step = (batch, q-tile, head, k-tile); k-tile innermost.

    Online (flash-style) softmax over key tiles; per-head output-projection
    contributions accumulated over the head axis into `out_sc`.
    """
    h = pl.program_id(2)
    kt = pl.program_id(3)

    @pl.when(kt == 0)
    def _():
        m_sc[...] = jnp.full_like(m_sc, -jnp.inf)
        l_sc[...] = jnp.zeros_like(l_sc)
        ctx_sc[...] = jnp.zeros_like(ctx_sc)

    q = q_ref[0, 0]            # (tq, dk)  native dtype (bf16 preferred)
    k = k_ref[0, 0]            # (tk, dk)
    v = v_ref[0, 0]            # (tk, dk)

    # Scores on the MXU with f32 accumulation; 1/sqrt(dk) already folded into Wq.
    s = lax.dot_general(q, k, (((1,), (1,)), ((), ())),
                        preferred_element_type=jnp.float32)        # (tq, tk) f32
    s = jnp.where(maskz_ref[0, 0] != 0, NEG_INF, s)

    # Online softmax update (f32 VPU/EUP math only).
    m_prev = m_sc[...]
    m_new = jnp.maximum(m_prev, jnp.max(s, axis=-1, keepdims=True))
    alpha = jnp.exp(m_prev - m_new)
    p = jnp.exp(s - m_new)                                          # (tq, tk) f32
    l_sc[...] = alpha * l_sc[...] + jnp.sum(p, axis=-1, keepdims=True)
    ctx_sc[...] = alpha * ctx_sc[...] + jnp.dot(
        p.astype(v.dtype), v, preferred_element_type=jnp.float32)   # (tq, dk)
    m_sc[...] = m_new

    # TODO(synk): nn.Dropout on the attention probabilities is treated as
    # identity (eval/inference mode); training dropout would use pltpu.prng_*.

    @pl.when(kt == pl.num_programs(3) - 1)
    def _():
        # Normalize once per (batch, q-tile, head): off the hot path, exact divide.
        ctx = ctx_sc[...] * pl.reciprocal(l_sc[...], approx=False)  # (tq, dk) f32
        contrib = jnp.dot(ctx.astype(wo_ref.dtype), wo_ref[0],
                          preferred_element_type=jnp.float32)       # (tq, D) f32

        @pl.when(h == 0)
        def _():
            out_sc[...] = contrib

        @pl.when(h > 0)
        def _():
            out_sc[...] = out_sc[...] + contrib

        @pl.when(h == pl.num_programs(2) - 1)
        def _():
            o_ref[0] = out_sc[...].astype(o_ref.dtype)


def _pick_tile(extent, max_tile):
    """Largest lane/sublane-friendly tile dividing `extent` (falls back to full)."""
    for cand in (1024, 512, 256, 128):
        if cand <= max_tile and extent % cand == 0:
            return cand
    return extent  # full extent is always legal per the (8,128) rule


def _vmem_limit_bytes():
    cap = 64 * 1024 * 1024
    try:
        cap = int(getattr(pltpu.get_tpu_info(), "vmem_capacity_bytes", cap))
    except Exception:
        pass
    # Leave headroom for compiler scratch; never go below the scoped default.
    return max(32 * 1024 * 1024, min(int(cap * 0.75), 100 * 1024 * 1024))


def multi_head_attention_forward(q, k, v, mask, wq, wk, wv, wo, *, num_heads):
    """Forward pass of MultiHeadAttentionBlock (eval mode, bias-free linears)."""
    B, S, D = q.shape
    H = num_heads
    assert D % H == 0, "d_model is not divisible by num_heads"
    dk = D // H

    # Hoisted projections: full DxD matmuls once under XLA; scale folded into Wq.
    scale = 1.0 / math.sqrt(dk)
    qh = jnp.dot(q, (wq * scale).astype(wq.dtype))
    kh = jnp.dot(k, wk)
    vh = jnp.dot(v, wv)
    # (B, H, S, dk) so every kernel block is full-extent in its last dim.
    qh = qh.reshape(B, S, H, dk).transpose(0, 2, 1, 3)
    kh = kh.reshape(B, S, H, dk).transpose(0, 2, 1, 3)
    vh = vh.reshape(B, S, H, dk).transpose(0, 2, 1, 3)

    # Per-head rows of Wo: out = concat_h(C_h) @ Wo == sum_h C_h @ Wo[h*dk:(h+1)*dk].
    wo_h = wo.reshape(H, dk, D)

    # "mask == 0" flags as int8; batch dim kept at its original extent (1 or B).
    if mask is None:
        maskz = jnp.zeros((1, 1, S, S), dtype=jnp.int8)
    else:
        inv = (jnp.asarray(mask) == 0)
        while inv.ndim < 4:
            inv = inv[None]
        maskz = jnp.broadcast_to(inv, (inv.shape[0], 1, S, S)).astype(jnp.int8)
    mb = maskz.shape[0]

    tq = _pick_tile(S, 512)
    tk = _pick_tile(S, 512)
    n_q = S // tq
    n_k = S // tk

    return pl.pallas_call(
        _mha_attn_kernel,
        out_shape=jax.ShapeDtypeStruct((B, S, D), q.dtype),
        grid_spec=pltpu.PrefetchScalarGridSpec(
            num_scalar_prefetch=0,
            grid=(B, n_q, H, n_k),
            in_specs=[
                # mask==0 flags (int8), size-1 batch maps to block 0.
                pl.BlockSpec((1, 1, tq, tk),
                             lambda b, qi, h, kt: ((b if mb > 1 else 0), 0, qi, kt)),
                pl.BlockSpec((1, 1, tq, dk), lambda b, qi, h, kt: (b, h, qi, 0)),  # Qh
                pl.BlockSpec((1, 1, tk, dk), lambda b, qi, h, kt: (b, h, kt, 0)),  # Kh
                pl.BlockSpec((1, 1, tk, dk), lambda b, qi, h, kt: (b, h, kt, 0)),  # Vh
                pl.BlockSpec((1, dk, D), lambda b, qi, h, kt: (h, 0, 0)),          # Wo_h
            ],
            out_specs=pl.BlockSpec((1, tq, D), lambda b, qi, h, kt: (b, qi, 0)),
            scratch_shapes=[
                pltpu.VMEM((tq, 1), jnp.float32),    # running max m
                pltpu.VMEM((tq, 1), jnp.float32),    # running denom l
                pltpu.VMEM((tq, dk), jnp.float32),   # unnormalized context
                pltpu.VMEM((tq, D), jnp.float32),    # sum over heads of ctx @ Wo_h
            ],
        ),
        compiler_params=pltpu.CompilerParams(
            dimension_semantics=("parallel", "parallel", "arbitrary", "arbitrary"),
            vmem_limit_bytes=_vmem_limit_bytes(),
        ),
    )(maskz, qh, kh, vh, wo_h)


def _reference(q, k, v, mask, wq, wk, wv, wo, num_heads):
    """Pure-JAX reference mirroring the PyTorch module (eval mode)."""
    B, S, D = q.shape
    dk = D // num_heads
    Q = (q @ wq).reshape(B, S, num_heads, dk).transpose(0, 2, 1, 3)
    K = (k @ wk).reshape(B, S, num_heads, dk).transpose(0, 2, 1, 3)
    V = (v @ wv).reshape(B, S, num_heads, dk).transpose(0, 2, 1, 3)
    scores = jnp.einsum("bhqd,bhkd->bhqk", Q, K) / math.sqrt(dk)
    if mask is not None:
        scores = jnp.where(mask == 0, NEG_INF, scores)
    p = jax.nn.softmax(scores, axis=-1)
    ctx = jnp.einsum("bhqk,bhkd->bhqd", p, V)
    ctx = ctx.transpose(0, 2, 1, 3).reshape(B, S, D)
    return ctx @ wo


if __name__ == "__main__":
    def run_case(case_idx, B, S, D, H):
        key = jax.random.fold_in(jax.random.PRNGKey(0), case_idx)
        kq, kk, kv, k1, k2, k3, k4 = jax.random.split(key, 7)
        q = jax.random.normal(kq, (B, S, D), dtype=jnp.float32)
        k = jax.random.normal(kk, (B, S, D), dtype=jnp.float32)
        v = jax.random.normal(kv, (B, S, D), dtype=jnp.float32)
        w_scale = 1.0 / math.sqrt(D)
        wq = jax.random.normal(k1, (D, D), dtype=jnp.float32) * w_scale
        wk = jax.random.normal(k2, (D, D), dtype=jnp.float32) * w_scale
        wv = jax.random.normal(k3, (D, D), dtype=jnp.float32) * w_scale
        wo = jax.random.normal(k4, (D, D), dtype=jnp.float32) * w_scale
        # Causal mask (triangular matrix of ones), shape (1, 1, S, S).
        mask = jnp.tril(jnp.ones((S, S), dtype=jnp.float32))[None, None]

        out = multi_head_attention_forward(q, k, v, mask, wq, wk, wv, wo, num_heads=H)
        out = jax.block_until_ready(out)

        ref = _reference(q, k, v, mask, wq, wk, wv, wo, H)
        assert out.shape == (B, S, D)
        assert jnp.allclose(out, ref, atol=5e-3, rtol=5e-3), \
            f"mismatch vs pure-JAX reference (B={B}, S={S}, D={D}, H={H})"

    # Small shape implied by the module (batch=2, seq=8, d_model=32, heads=4).
    run_case(0, B=2, S=8, D=32, H=4)
    # Larger shape exercising multi-tile q/k grid axes and head accumulation.
    run_case(1, B=1, S=384, D=128, H=8)

    print("KERNEL_OK")
</pallas_src>

<mosaic_0001>
module attributes {stable_mosaic.version = 11 : i64} {
  func.func @_mha_attn_kernel(%arg0: i32, %arg1: i32, %arg2: i32, %arg3: i32, %arg4: memref<1x1x8x8xi8, #tpu.memory_space<vmem>>, %arg5: memref<1x1x8x8xf32, #tpu.memory_space<vmem>>, %arg6: memref<1x1x8x8xf32, #tpu.memory_space<vmem>>, %arg7: memref<1x1x8x8xf32, #tpu.memory_space<vmem>>, %arg8: memref<1x8x32xf32, #tpu.memory_space<vmem>>, %arg9: memref<1x8x32xf32, #tpu.memory_space<vmem>>, %arg10: memref<8x1xf32, #tpu.memory_space<vmem>>, %arg11: memref<8x1xf32, #tpu.memory_space<vmem>>, %arg12: memref<8x8xf32, #tpu.memory_space<vmem>>, %arg13: memref<8x32xf32, #tpu.memory_space<vmem>>) attributes {dimension_semantics = [#tpu.dimension_semantics<parallel>, #tpu.dimension_semantics<parallel>, #tpu.dimension_semantics<arbitrary>, #tpu.dimension_semantics<arbitrary>], iteration_bounds = array<i64: 2, 1, 4, 1>, scalar_prefetch = 0 : i64, scratch_operands = 4 : i64, tpu.core_type = #tpu.core_type<tc>, window_params = [{transform_indices = @transform_0, window_bounds = array<i64: 1, 1, 8, 8>}, {transform_indices = @transform_1, window_bounds = array<i64: 1, 1, 8, 8>}, {transform_indices = @transform_2, window_bounds = array<i64: 1, 1, 8, 8>}, {transform_indices = @transform_3, window_bounds = array<i64: 1, 1, 8, 8>}, {transform_indices = @transform_4, window_bounds = array<i64: 1, 8, 32>}, {transform_indices = @transform_5, window_bounds = array<i64: 1, 8, 32>}]} {
    %c0_i32 = arith.constant 0 : i32
    %0 = arith.cmpi eq, %arg3, %c0_i32 : i32
    %1 = arith.extui %0 : i1 to i32
    %c0_i32_0 = arith.constant 0 : i32
    %2 = arith.cmpi ne, %1, %c0_i32_0 : i32
    scf.if %2 {
      %cst_34 = arith.constant 0xFF800000 : f32
      %41 = vector.broadcast %cst_34 : f32 to vector<8x1xf32>
      %c0_35 = arith.constant 0 : index
      %c0_36 = arith.constant 0 : index
      %42 = vector.load %arg10[%c0_35, %c0_36] : memref<8x1xf32, #tpu.memory_space<vmem>>, vector<8x1xf32>
      tpu.vector_store %arg10[%c0_35, %c0_36], %41 {strides = array<i32>} : memref<8x1xf32, #tpu.memory_space<vmem>>, vector<8x1xf32>,
      %cst_37 = arith.constant 0.000000e+00 : f32
      %43 = vector.broadcast %cst_37 : f32 to vector<8x1xf32>
      %c0_38 = arith.constant 0 : index
      %c0_39 = arith.constant 0 : index
      %44 = vector.load %arg11[%c0_38, %c0_39] : memref<8x1xf32, #tpu.memory_space<vmem>>, vector<8x1xf32>
      tpu.vector_store %arg11[%c0_38, %c0_39], %43 {strides = array<i32>} : memref<8x1xf32, #tpu.memory_space<vmem>>, vector<8x1xf32>,
      %cst_40 = arith.constant 0.000000e+00 : f32
      %45 = vector.broadcast %cst_40 : f32 to vector<8x8xf32>
      %c0_41 = arith.constant 0 : index
      %c0_42 = arith.constant 0 : index
      %46 = vector.load %arg12[%c0_41, %c0_42] : memref<8x8xf32, #tpu.memory_space<vmem>>, vector<8x8xf32>
      tpu.vector_store %arg12[%c0_41, %c0_42], %45 {strides = array<i32>} : memref<8x8xf32, #tpu.memory_space<vmem>>, vector<8x8xf32>,
    } else {
    }
    %c0 = arith.constant 0 : index
    %c0_1 = arith.constant 0 : index
    %c0_2 = arith.constant 0 : index
    %c0_3 = arith.constant 0 : index
    %3 = vector.load %arg5[%c0, %c0_1, %c0_2, %c0_3] : memref<1x1x8x8xf32, #tpu.memory_space<vmem>>, vector<1x1x8x8xf32>
    %4 = vector.shape_cast %3 : vector<1x1x8x8xf32> to vector<8x8xf32>
    %c0_4 = arith.constant 0 : index
    %c0_5 = arith.constant 0 : index
    %c0_6 = arith.constant 0 : index
    %c0_7 = arith.constant 0 : index
    %5 = vector.load %arg6[%c0_4, %c0_5, %c0_6, %c0_7] : memref<1x1x8x8xf32, #tpu.memory_space<vmem>>, vector<1x1x8x8xf32>
    %6 = vector.shape_cast %5 : vector<1x1x8x8xf32> to vector<8x8xf32>
    %c0_8 = arith.constant 0 : index
    %c0_9 = arith.constant 0 : index
    %c0_10 = arith.constant 0 : index
    %c0_11 = arith.constant 0 : index
    %7 = vector.load %arg7[%c0_8, %c0_9, %c0_10, %c0_11] : memref<1x1x8x8xf32, #tpu.memory_space<vmem>>, vector<1x1x8x8xf32>
    %8 = vector.shape_cast %7 : vector<1x1x8x8xf32> to vector<8x8xf32>
    %cst = arith.constant dense<0.000000e+00> : vector<8x8xf32>
    %9 = tpu.matmul %4, %6, %cst {dimension_numbers = #tpu.dot_dimension_numbers<[1], [1], [0], [0], [0, 0, 1, 0], [], []>} : vector<8x8xf32>, vector<8x8xf32>, vector<8x8xf32> -> vector<8x8xf32>
    %c0_12 = arith.constant 0 : index
    %c0_13 = arith.constant 0 : index
    %c0_14 = arith.constant 0 : index
    %c0_15 = arith.constant 0 : index
    %10 = vector.load %arg4[%c0_12, %c0_13, %c0_14, %c0_15] : memref<1x1x8x8xi8, #tpu.memory_space<vmem>>, vector<1x1x8x8xi8>
    %11 = vector.shape_cast %10 : vector<1x1x8x8xi8> to vector<8x8xi8>
    %c0_i8 = arith.constant 0 : i8
    %12 = vector.broadcast %c0_i8 : i8 to vector<8x8xi8>
    %13 = arith.cmpi ne, %11, %12 : vector<8x8xi8>
    %cst_16 = arith.constant -1.000000e+09 : f32
    %14 = vector.broadcast %cst_16 : f32 to vector<8x8xf32>
    %15 = arith.select %13, %14, %9 : vector<8x8xi1>, vector<8x8xf32>
    %c0_17 = arith.constant 0 : index
    %c0_18 = arith.constant 0 : index
    %16 = vector.load %arg10[%c0_17, %c0_18] : memref<8x1xf32, #tpu.memory_space<vmem>>, vector<8x1xf32>
    %cst_19 = arith.constant dense<0xFF800000> : vector<8xf32>
    %17 = vector.multi_reduction <maximumf>, %15, %cst_19 [1] : vector<8x8xf32> to vector<8xf32>
    %18 = vector.shape_cast %17 : vector<8xf32> to vector<8x1xf32>
    %19 = arith.maximumf %16, %18 : vector<8x1xf32>
    %20 = arith.subf %16, %19 : vector<8x1xf32>
    %21 = math.exp %20 : vector<8x1xf32>
    %22 = vector.broadcast %19 : vector<8x1xf32> to vector<8x8xf32>
    %23 = arith.subf %15, %22 : vector<8x8xf32>
    %24 = math.exp %23 : vector<8x8xf32>
    %c0_20 = arith.constant 0 : index
    %c0_21 = arith.constant 0 : index
    %25 = vector.load %arg11[%c0_20, %c0_21] : memref<8x1xf32, #tpu.memory_space<vmem>>, vector<8x1xf32>
    %26 = arith.mulf %21, %25 : vector<8x1xf32>
    %cst_22 = arith.constant dense<0.000000e+00> : vector<8xf32>
    %27 = vector.multi_reduction <add>, %24, %cst_22 [1] : vector<8x8xf32> to vector<8xf32>
    %28 = vector.shape_cast %27 : vector<8xf32> to vector<8x1xf32>
    %29 = arith.addf %26, %28 : vector<8x1xf32>
    %c0_23 = arith.constant 0 : index
    %c0_24 = arith.constant 0 : index
    %30 = vector.load %arg11[%c0_23, %c0_24] : memref<8x1xf32, #tpu.memory_space<vmem>>, vector<8x1xf32>
    tpu.vector_store %arg11[%c0_23, %c0_24], %29 {strides = array<i32>} : memref<8x1xf32, #tpu.memory_space<vmem>>, vector<8x1xf32>,
    %c0_25 = arith.constant 0 : index
    %c0_26 = arith.constant 0 : index
    %31 = vector.load %arg12[%c0_25, %c0_26] : memref<8x8xf32, #tpu.memory_space<vmem>>, vector<8x8xf32>
    %32 = vector.broadcast %21 : vector<8x1xf32> to vector<8x8xf32>
    %33 = arith.mulf %32, %31 : vector<8x8xf32>
    %cst_27 = arith.constant dense<0.000000e+00> : vector<8x8xf32>
    %34 = tpu.matmul %24, %8, %cst_27 {dimension_numbers = #tpu.dot_dimension_numbers<[1], [0], [0], [1], [0, 0, 1, 1], [], []>} : vector<8x8xf32>, vector<8x8xf32>, vector<8x8xf32> -> vector<8x8xf32>
    %35 = arith.addf %33, %34 : vector<8x8xf32>
    %c0_28 = arith.constant 0 : index
    %c0_29 = arith.constant 0 : index
    %36 = vector.load %arg12[%c0_28, %c0_29] : memref<8x8xf32, #tpu.memory_space<vmem>>, vector<8x8xf32>
    tpu.vector_store %arg12[%c0_28, %c0_29], %35 {strides = array<i32>} : memref<8x8xf32, #tpu.memory_space<vmem>>, vector<8x8xf32>,
    %c0_30 = arith.constant 0 : index
    %c0_31 = arith.constant 0 : index
    %37 = vector.load %arg10[%c0_30, %c0_31] : memref<8x1xf32, #tpu.memory_space<vmem>>, vector<8x1xf32>
    tpu.vector_store %arg10[%c0_30, %c0_31], %19 {strides = array<i32>} : memref<8x1xf32, #tpu.memory_space<vmem>>, vector<8x1xf32>,
    %c0_i32_32 = arith.constant 0 : i32
    %38 = arith.cmpi eq, %arg3, %c0_i32_32 : i32
    %39 = arith.extui %38 : i1 to i32
    %c0_i32_33 = arith.constant 0 : i32
    %40 = arith.cmpi ne, %39, %c0_i32_33 : i32
    scf.if %40 {
      %c0_34 = arith.constant 0 : index
      %c0_35 = arith.constant 0 : index
      %41 = vector.load %arg12[%c0_34, %c0_35] : memref<8x8xf32, #tpu.memory_space<vmem>>, vector<8x8xf32>
      %c0_36 = arith.constant 0 : index
      %c0_37 = arith.constant 0 : index
      %42 = vector.load %arg11[%c0_36, %c0_37] : memref<8x1xf32, #tpu.memory_space<vmem>>, vector<8x1xf32>
      %43 = tpu.reciprocal %42 : vector<8x1xf32> -> vector<8x1xf32>
      %44 = vector.broadcast %43 : vector<8x1xf32> to vector<8x8xf32>
      %45 = arith.mulf %41, %44 : vector<8x8xf32>
      %c0_38 = arith.constant 0 : index
      %c0_39 = arith.constant 0 : index
      %c0_40 = arith.constant 0 : index
      %46 = vector.load %arg8[%c0_38, %c0_39, %c0_40] : memref<1x8x32xf32, #tpu.memory_space<vmem>>, vector<1x8x32xf32>
      %47 = vector.shape_cast %46 : vector<1x8x32xf32> to vector<8x32xf32>
      %cst_41 = arith.constant dense<0.000000e+00> : vector<8x32xf32>
      %48 = tpu.matmul %45, %47, %cst_41 {dimension_numbers = #tpu.dot_dimension_numbers<[1], [0], [0], [1], [0, 0, 1, 1], [], []>} : vector<8x8xf32>, vector<8x32xf32>, vector<8x32xf32> -> vector<8x32xf32>
      %c0_i32_42 = arith.constant 0 : i32
      %49 = arith.cmpi eq, %arg2, %c0_i32_42 : i32
      %50 = arith.extui %49 : i1 to i32
      %c0_i32_43 = arith.constant 0 : i32
      %51 = arith.cmpi ne, %50, %c0_i32_43 : i32
      scf.if %51 {
        %c0_47 = arith.constant 0 : index
        %c0_48 = arith.constant 0 : index
        %58 = vector.load %arg13[%c0_47, %c0_48] : memref<8x32xf32, #tpu.memory_space<vmem>>, vector<8x32xf32>
        tpu.vector_store %arg13[%c0_47, %c0_48], %48 {strides = array<i32>} : memref<8x32xf32, #tpu.memory_space<vmem>>, vector<8x32xf32>,
      } else {
      }
      %c0_i32_44 = arith.constant 0 : i32
      %52 = arith.cmpi sgt, %arg2, %c0_i32_44 : i32
      %53 = arith.extui %52 : i1 to i32
      %c0_i32_45 = arith.constant 0 : i32
      %54 = arith.cmpi ne, %53, %c0_i32_45 : i32
      scf.if %54 {
        %c0_47 = arith.constant 0 : index
        %c0_48 = arith.constant 0 : index
        %58 = vector.load %arg13[%c0_47, %c0_48] : memref<8x32xf32, #tpu.memory_space<vmem>>, vector<8x32xf32>
        %59 = arith.addf %58, %48 : vector<8x32xf32>
        %c0_49 = arith.constant 0 : index
        %c0_50 = arith.constant 0 : index
        %60 = vector.load %arg13[%c0_49, %c0_50] : memref<8x32xf32, #tpu.memory_space<vmem>>, vector<8x32xf32>
        tpu.vector_store %arg13[%c0_49, %c0_50], %59 {strides = array<i32>} : memref<8x32xf32, #tpu.memory_space<vmem>>, vector<8x32xf32>,
      } else {
      }
      %c3_i32 = arith.constant 3 : i32
      %55 = arith.cmpi eq, %arg2, %c3_i32 : i32
      %56 = arith.extui %55 : i1 to i32
      %c0_i32_46 = arith.constant 0 : i32
      %57 = arith.cmpi ne, %56, %c0_i32_46 : i32
      scf.if %57 {
        %c0_47 = arith.constant 0 : index
        %c0_48 = arith.constant 0 : index
        %58 = vector.load %arg13[%c0_47, %c0_48] : memref<8x32xf32, #tpu.memory_space<vmem>>, vector<8x32xf32>
        %c0_49 = arith.constant 0 : index
        %c0_50 = arith.constant 0 : index
        %c0_51 = arith.constant 0 : index
        %59 = vector.load %arg9[%c0_49, %c0_50, %c0_51] : memref<1x8x32xf32, #tpu.memory_space<vmem>>, vector<1x8x32xf32>
        %60 = vector.shape_cast %59 : vector<1x8x32xf32> to vector<8x32xf32>
        %61 = vector.shape_cast %58 : vector<8x32xf32> to vector<1x8x32xf32>
        tpu.vector_store %arg9[%c0_49, %c0_50, %c0_51], %61 {strides = array<i32>} : memref<1x8x32xf32, #tpu.memory_space<vmem>>, vector<1x8x32xf32>,
      } else {
      }
    } else {
    }
    return
  }
  func.func @transform_0(%arg0: i32, %arg1: i32, %arg2: i32, %arg3: i32) -> (i32, i32, i32, i32) {
    %c0_i32 = arith.constant 0 : i32
    %c0_i32_0 = arith.constant 0 : i32
    %c0_i32_1 = arith.constant 0 : i32
    return %c0_i32, %c0_i32_0, %arg1, %arg3 : i32, i32, i32, i32
  }
  func.func @transform_1(%arg0: i32, %arg1: i32, %arg2: i32, %arg3: i32) -> (i32, i32, i32, i32) {
    %c0_i32 = arith.constant 0 : i32
    %c0_i32_0 = arith.constant 0 : i32
    return %arg0, %arg2, %arg1, %c0_i32 : i32, i32, i32, i32
  }
  func.func @transform_2(%arg0: i32, %arg1: i32, %arg2: i32, %arg3: i32) -> (i32, i32, i32, i32) {
    %c0_i32 = arith.constant 0 : i32
    %c0_i32_0 = arith.constant 0 : i32
    return %arg0, %arg2, %arg3, %c0_i32 : i32, i32, i32, i32
  }
  func.func @transform_3(%arg0: i32, %arg1: i32, %arg2: i32, %arg3: i32) -> (i32, i32, i32, i32) {
    %c0_i32 = arith.constant 0 : i32
    %c0_i32_0 = arith.constant 0 : i32
    return %arg0, %arg2, %arg3, %c0_i32 : i32, i32, i32, i32
  }
  func.func @transform_4(%arg0: i32, %arg1: i32, %arg2: i32, %arg3: i32) -> (i32, i32, i32) {
    %c0_i32 = arith.constant 0 : i32
    %c0_i32_0 = arith.constant 0 : i32
    %c0_i32_1 = arith.constant 0 : i32
    return %arg2, %c0_i32, %c0_i32_0 : i32, i32, i32
  }
  func.func @transform_5(%arg0: i32, %arg1: i32, %arg2: i32, %arg3: i32) -> (i32, i32, i32) {
    %c0_i32 = arith.constant 0 : i32
    %c0_i32_0 = arith.constant 0 : i32
    return %arg0, %arg1, %c0_i32 : i32, i32, i32
  }
}

</mosaic_0001>

<llo_original>
// kernel: tpu_custom_call.1
$region0: #{tpu_custom_call.1}
  #allocation0 [shape = 'u32[]', space=smem, size = 0x4, offset = 0x4, fixed_abs, tag = 'smem constant byte address 0x4 - core index']
  #allocation1 [shape = 'u32[144,128]{1,0:T(1,128)}', space=vmem, size = 0x12000, scoped, tag = 'internal scratch']
  #allocation2 [shape = 'f32[8,1]{1,0:T(8,128)}', space=vmem, size = 0x1000, scoped, tag = 'scratch operand']
  #allocation3 [shape = 'f32[8,1]{1,0:T(8,128)}', space=vmem, size = 0x1000, scoped, tag = 'scratch operand']
  #allocation4 [shape = 'f32[8,8]{1,0:T(8,128)}', space=vmem, size = 0x1000, scoped, tag = 'scratch operand']
  #allocation5 [shape = 'f32[8,32]{1,0:T(8,128)}', space=vmem, size = 0x1000, scoped, tag = 'scratch operand']
  %s0 = inlined_call_operand.hbm [shape: s8[1,1,8,8], index: 0, kind: input, shape index: {}]
  %s1 = inlined_call_operand.hbm [shape: f32[2,4,8,8], index: 1, kind: input, shape index: {}]
  %s2 = inlined_call_operand.hbm [shape: f32[2,4,8,8], index: 2, kind: input, shape index: {}]
  %s3 = inlined_call_operand.hbm [shape: f32[2,4,8,8], index: 3, kind: input, shape index: {}]
  %s4 = inlined_call_operand.hbm [shape: f32[4,8,32], index: 4, kind: input, shape index: {}]
  %s5 = inlined_call_operand.hbm [shape: f32[2,8,32], index: 5, kind: output, shape index: {}]
  %s6 = sld [smem:[#allocation0]]
  $region93: #{tpu_custom_call.1} parent=0
    _
  %s8 = ssub.s32 1, %s6
  %s9 = scalar_select 0, %s8, %s6
  $region1: #{tpu_custom_call.1} parent=0
    #allocation6 [shape = 'u8[1024]{0}', space=vmem, size = 0x400, scoped, tag = 'input window, operand 0, single buffered']
    #allocation7 [shape = 's32[2]{0}', space=sflag, size = 0x8, scoped, tag = 'scoped memory for tpu_custom_call.1']
    #allocation8 [shape = 's32[2]{0}', space=sflag, size = 0x8, scoped, tag = 'scoped memory for tpu_custom_call.1']
    #allocation9 [shape = 'u8[8192]{0}', space=vmem, size = 0x2000, scoped, tag = 'input window, operand 1']
    #allocation10 [shape = 's32[2]{0}', space=sflag, size = 0x8, scoped, tag = 'scoped memory for tpu_custom_call.1']
    #allocation11 [shape = 'u8[8192]{0}', space=vmem, size = 0x2000, scoped, tag = 'input window, operand 2']
    #allocation12 [shape = 'u8[8192]{0}', space=vmem, size = 0x2000, scoped, tag = 'input window, operand 3']
    #allocation13 [shape = 's32[2]{0}', space=sflag, size = 0x8, scoped, tag = 'scoped memory for tpu_custom_call.1']
    #allocation14 [shape = 'u8[8192]{0}', space=vmem, size = 0x2000, scoped, tag = 'input window, operand 4']
    #allocation15 [shape = 'u8[8192]{0}', space=vmem, size = 0x2000, scoped, tag = 'output window, operand 0']
    %10 = vsyncpa [#allocation7], 0
    %11 = vsyncpa [#allocation10], 0
    %s12 = scalar_lea.sflag [#allocation10], 1
    %13 = vsyncpa %s12, 0
    %14 = vsyncpa [#allocation13], 0
    %s15 = scalar_lea.sflag [#allocation13], 1
    %16 = vsyncpa %s15, 0
    %17 = vsyncpa [#allocation8], 0
    %s18 = scalar_lea.sflag [#allocation8], 1
    %19 = vsyncpa %s18, 0
    loop: start=0, step=1, limit=10
    $region2: #{tpu_custom_call.1} parent=1 // loop_pre_header
      _
    $region3: #{tpu_custom_call.1} parent=1 // loop_header
      %s21 = sphi 0, %s25
      %p22 = scmp.ge.s32.totalorder %s21, 10
      %s28 = sphi 0, %s54
      %s29 = sphi 0, %s50
      %s30 = sphi 0, %s46
      %s31 = sphi 0, %s42
      %s32 = sphi 0, %s28
      %s33 = sphi 0, %s29
      %s34 = sphi 0, %s30
      %s35 = sphi 0, %s31
      %s36 = sphi 0, %s32
      %s37 = sphi 0, %s33
      %s38 = sphi 0, %s34
      %s39 = sphi 0, %s35
      %s59 = sphi 0, %s61
      %s62 = sphi 0, %s59
      %s63 = sphi 0, %s62
      %s79 = sphi 0, %s63
      %s89 = sphi 0, %s91
      %s92 = sphi 0, %s89
      %s93 = sphi 0, %s92
      %s109 = sphi 0, %s93
      %s119 = sphi 0, %s121
      %s122 = sphi 0, %s119
      %s123 = sphi 0, %s122
      %s139 = sphi 0, %s123
      %s149 = sphi 0, %s151
      %s152 = sphi 0, %s149
      %s153 = sphi 0, %s152
      %s169 = sphi 0, %s153
      %s175 = sphi 0, %s177
      %s178 = sphi 0, %s175
      %s179 = sphi 0, %s178
      %s195 = sphi 0, %s179
      %s203 = sphi 0, %s205
      %s206 = sphi 0, %s203
      %s207 = sphi 0, %s206
      %s223 = sphi 0, %s207
    $region4: #{tpu_custom_call.1} parent=1 // loop_header_branch
      %24 = sbr.rel (%p22) target = $region8
    $region5: #{tpu_custom_call.1} parent=1 // loop_body
      %s26 = ssub.s32 %s21, 1
      %s27 = ssub.s32 %s21, 2
      %s40 = sadd.s32 1, %s31
      %p41 = scmp.ge.s32.totalorder %s40, 1
      %s42 = scalar_select %p41, 0, %s40
      %s43 = sadd.s32 1, %s30
      %s44 = scalar_select %p41, %s43, %s30
      %p45 = scmp.ge.s32.totalorder %s44, 4
      %s46 = scalar_select %p45, 0, %s44
      %s47 = sadd.s32 1, %s29
      %s48 = scalar_select %p45, %s47, %s29
      %p49 = scmp.ge.s32.totalorder %s48, 1
      %s50 = scalar_select %p49, 0, %s48
      %s51 = sadd.s32 1, %s28
      %s52 = scalar_select %p49, %s51, %s28
      %p53 = scmp.ge.s32.totalorder %s52, 2
      %s54 = scalar_select %p53, 0, %s52
      %s55 = ssub.s32 %s29, %s50
      %s56 = ssub.s32 %s31, %s42
      %s57 = sor.u32 %s55, %s56
      %p58 = scmp.eq.s32.totalorder %s57, 0
      %s60 = sadd.s32 %s59, 1
      %s61 = scalar_select %p58, %s59, %s60
      %p64 = pneg %p58
      %p65 = scmp.eq.s32.totalorder %s21, 7
      %p66 = por %p64, %p65
      %p67 = scmp.ne.s32.totalorder %s59, %s62
      %p68 = scmp.eq.s32.totalorder %s21, 0
      %p69 = por %p67, %p68
      %p70 = scmp.ne.s32.totalorder %s59, %s62
      %p71 = scmp.eq.s32.totalorder %s26, 7
      %p72 = por %p70, %p71
      %p73 = scmp.ne.s32.totalorder %s62, %s63
      %p74 = scmp.eq.s32.totalorder %s26, 0
      %p75 = por %p73, %p74
      %p76 = scmp.ne.s32.totalorder %s62, %s63
      %p77 = scmp.eq.s32.totalorder %s27, 7
      %p78 = por %p76, %p77
      %p80 = scmp.ne.s32.totalorder %s63, %s79
      %p81 = scmp.eq.s32.totalorder %s27, 0
      %p82 = por %p80, %p81
      %s83 = ssub.s32 %s28, %s54
      %s84 = ssub.s32 %s30, %s46
      %s85 = sor.u32 %s83, %s84
      %s86 = ssub.s32 %s29, %s50
      %s87 = sor.u32 %s85, %s86
      %p88 = scmp.eq.s32.totalorder %s87, 0
      %s90 = sadd.s32 %s89, 1
      %s91 = scalar_select %p88, %s89, %s90
      %p94 = pneg %p88
      %p95 = scmp.eq.s32.totalorder %s21, 7
      %p96 = por %p94, %p95
      %p97 = scmp.ne.s32.totalorder %s89, %s92
      %p98 = scmp.eq.s32.totalorder %s21, 0
      %p99 = por %p97, %p98
      %p100 = scmp.ne.s32.totalorder %s89, %s92
      %p101 = scmp.eq.s32.totalorder %s26, 7
      %p102 = por %p100, %p101
      %p103 = scmp.ne.s32.totalorder %s92, %s93
      %p104 = scmp.eq.s32.totalorder %s26, 0
      %p105 = por %p103, %p104
      %p106 = scmp.ne.s32.totalorder %s92, %s93
      %p107 = scmp.eq.s32.totalorder %s27, 7
      %p108 = por %p106, %p107
      %p110 = scmp.ne.s32.totalorder %s93, %s109
      %p111 = scmp.eq.s32.totalorder %s27, 0
      %p112 = por %p110, %p111
      %s113 = ssub.s32 %s28, %s54
      %s114 = ssub.s32 %s30, %s46
      %s115 = sor.u32 %s113, %s114
      %s116 = ssub.s32 %s31, %s42
      %s117 = sor.u32 %s115, %s116
      %p118 = scmp.eq.s32.totalorder %s117, 0
      %s120 = sadd.s32 %s119, 1
      %s121 = scalar_select %p118, %s119, %s120
      %p124 = pneg %p118
      %p125 = scmp.eq.s32.totalorder %s21, 7
      %p126 = por %p124, %p125
      %p127 = scmp.ne.s32.totalorder %s119, %s122
      %p128 = scmp.eq.s32.totalorder %s21, 0
      %p129 = por %p127, %p128
      %p130 = scmp.ne.s32.totalorder %s119, %s122
      %p131 = scmp.eq.s32.totalorder %s26, 7
      %p132 = por %p130, %p131
      %p133 = scmp.ne.s32.totalorder %s122, %s123
      %p134 = scmp.eq.s32.totalorder %s26, 0
      %p135 = por %p133, %p134
      %p136 = scmp.ne.s32.totalorder %s122, %s123
      %p137 = scmp.eq.s32.totalorder %s27, 7
      %p138 = por %p136, %p137
      %p140 = scmp.ne.s32.totalorder %s123, %s139
      %p141 = scmp.eq.s32.totalorder %s27, 0
      %p142 = por %p140, %p141
      %s143 = ssub.s32 %s28, %s54
      %s144 = ssub.s32 %s30, %s46
      %s145 = sor.u32 %s143, %s144
      %s146 = ssub.s32 %s31, %s42
      %s147 = sor.u32 %s145, %s146
      %p148 = scmp.eq.s32.totalorder %s147, 0
      %s150 = sadd.s32 %s149, 1
      %s151 = scalar_select %p148, %s149, %s150
      %p154 = pneg %p148
      %p155 = scmp.eq.s32.totalorder %s21, 7
      %p156 = por %p154, %p155
      %p157 = scmp.ne.s32.totalorder %s149, %s152
      %p158 = scmp.eq.s32.totalorder %s21, 0
      %p159 = por %p157, %p158
      %p160 = scmp.ne.s32.totalorder %s149, %s152
      %p161 = scmp.eq.s32.totalorder %s26, 7
      %p162 = por %p160, %p161
      %p163 = scmp.ne.s32.totalorder %s152, %s153
      %p164 = scmp.eq.s32.totalorder %s26, 0
      %p165 = por %p163, %p164
      %p166 = scmp.ne.s32.totalorder %s152, %s153
      %p167 = scmp.eq.s32.totalorder %s27, 7
      %p168 = por %p166, %p167
      %p170 = scmp.ne.s32.totalorder %s153, %s169
      %p171 = scmp.eq.s32.totalorder %s27, 0
      %p172 = por %p170, %p171
      %s173 = ssub.s32 %s30, %s46
      %p174 = scmp.eq.s32.totalorder %s173, 0
      %s176 = sadd.s32 %s175, 1
      %s177 = scalar_select %p174, %s175, %s176
      %p180 = pneg %p174
      %p181 = scmp.eq.s32.totalorder %s21, 7
      %p182 = por %p180, %p181
      %p183 = scmp.ne.s32.totalorder %s175, %s178
      %p184 = scmp.eq.s32.totalorder %s21, 0
      %p185 = por %p183, %p184
      %p186 = scmp.ne.s32.totalorder %s175, %s178
      %p187 = scmp.eq.s32.totalorder %s26, 7
      %p188 = por %p186, %p187
      %p189 = scmp.ne.s32.totalorder %s178, %s179
      %p190 = scmp.eq.s32.totalorder %s26, 0
      %p191 = por %p189, %p190
      %p192 = scmp.ne.s32.totalorder %s178, %s179
      %p193 = scmp.eq.s32.totalorder %s27, 7
      %p194 = por %p192, %p193
      %p196 = scmp.ne.s32.totalorder %s179, %s195
      %p197 = scmp.eq.s32.totalorder %s27, 0
      %p198 = por %p196, %p197
      %s199 = ssub.s32 %s28, %s54
      %s200 = ssub.s32 %s29, %s50
      %s201 = sor.u32 %s199, %s200
      %p202 = scmp.eq.s32.totalorder %s201, 0
      %s204 = sadd.s32 %s203, 1
      %s205 = scalar_select %p202, %s203, %s204
      %p208 = pneg %p202
      %p209 = scmp.eq.s32.totalorder %s21, 7
      %p210 = por %p208, %p209
      %p211 = scmp.ne.s32.totalorder %s203, %s206
      %p212 = scmp.eq.s32.totalorder %s21, 0
      %p213 = por %p211, %p212
      %p214 = scmp.ne.s32.totalorder %s203, %s206
      %p215 = scmp.eq.s32.totalorder %s26, 7
      %p216 = por %p214, %p215
      %p217 = scmp.ne.s32.totalorder %s206, %s207
      %p218 = scmp.eq.s32.totalorder %s26, 0
      %p219 = por %p217, %p218
      %p220 = scmp.ne.s32.totalorder %s206, %s207
      %p221 = scmp.eq.s32.totalorder %s27, 7
      %p222 = por %p220, %p221
      %p224 = scmp.ne.s32.totalorder %s207, %s223
      %p225 = scmp.eq.s32.totalorder %s27, 0
      %p226 = por %p224, %p225
      %p227 = scmp.le.s32.totalorder 1, %s21
      %p228 = scmp.lt.s32.totalorder %s21, 9
      %p229 = pnand %p227, %p228
      %p230 = pneg %p229
      // Predicated region
      $region9: #{tpu_custom_call.1} parent=5 // pred_check
        _
      $region10: #{tpu_custom_call.1} parent=5 // pred_check_branch
        %232 = sbr.rel (%p229) target = $region12
      $region11: #{tpu_custom_call.1} parent=5 // pred_region
        %s233 = ssub.s32 %s21, 1
        // Predicated region
        $region13: #{tpu_custom_call.1} parent=11 // pred_check
          %p234 = pneg %p75
        $region14: #{tpu_custom_call.1} parent=11 // pred_check_branch
          %236 = sbr.rel (%p234) target = $region16
        $region15: #{tpu_custom_call.1} parent=11 // pred_region
          %s238 = ssub.s32 32, 32
          %239 = vsyncadd [#allocation7], %s238
          %s240 = sadd.s32 %s35, %s33
          %s241 = smul.addr %s240, 32
          %s242 = scalar_lea.hbm %s0, %s241
          %s244 = sshll.u32 [#allocation6], 4
          %s245 = int_to_ptr.vmem [resolvable:$true] %s244
          %247 = dma.hbm_to_vmem [thread:$0]  %s242, 32, %s245, [#allocation7]
        $region16: #{tpu_custom_call.1} parent=11 // pred_fallthru
          _
      $region12: #{tpu_custom_call.1} parent=5 // pred_fallthru
        _
      %p248 = scmp.lt.s32.totalorder %s21, 8
      // Predicated region
      $region17: #{tpu_custom_call.1} parent=5 // pred_check
        %p249 = pneg %p248
      $region18: #{tpu_custom_call.1} parent=5 // pred_check_branch
        %251 = sbr.rel (%p249) target = $region20
      $region19: #{tpu_custom_call.1} parent=5 // pred_region
        // Predicated region
        $region21: #{tpu_custom_call.1} parent=19 // pred_check
          %p252 = pneg %p99
        $region22: #{tpu_custom_call.1} parent=19 // pred_check_branch
          %254 = sbr.rel (%p252) target = $region24
        $region23: #{tpu_custom_call.1} parent=19 // pred_region
          %s255 = sand.u32 %s21, 1
          %s256 = scalar_lea.sflag [#allocation10], %s255
          %s257 = sand.u32 %s89, 1
          %s258 = smul.addr %s257, 8
          %s259 = scalar_lea.vmem [#allocation9], %s258
          %s261 = ssub.s32 128, 128
          %262 = vsyncadd %s256, %s261
          %s263 = sadd.s32 %s29, %s30
          %s264 = smul.addr %s28, 4
          %s265 = sadd.s32 %s263, %s264
          %s266 = smul.addr %s265, 128
          %s267 = scalar_lea.hbm %s1, %s266
          %s269 = sshll.u32 %s259, 4
          %s270 = int_to_ptr.vmem [resolvable:$true] %s269
          %272 = dma.hbm_to_vmem [thread:$0]  %s267, 128, %s270, %s256
        $region24: #{tpu_custom_call.1} parent=19 // pred_fallthru
          _
        // Predicated region
        $region25: #{tpu_custom_call.1} parent=19 // pred_check
          %p273 = pneg %p129
        $region26: #{tpu_custom_call.1} parent=19 // pred_check_branch
          %275 = sbr.rel (%p273) target = $region28
        $region27: #{tpu_custom_call.1} parent=19 // pred_region
          %s276 = sand.u32 %s21, 1
          %s277 = scalar_lea.sflag [#allocation10], %s276
          %s278 = sand.u32 %s119, 1
          %s279 = smul.addr %s278, 8
          %s280 = scalar_lea.vmem [#allocation11], %s279
          %s282 = ssub.s32 128, 128
          %283 = vsyncadd %s277, %s282
          %s284 = sadd.s32 %s31, %s30
          %s285 = smul.addr %s28, 4
          %s286 = sadd.s32 %s284, %s285
          %s287 = smul.addr %s286, 128
          %s288 = scalar_lea.hbm %s2, %s287
          %s290 = sshll.u32 %s280, 4
          %s291 = int_to_ptr.vmem [resolvable:$true] %s290
          %293 = dma.hbm_to_vmem [thread:$0]  %s288, 128, %s291, %s277
        $region28: #{tpu_custom_call.1} parent=19 // pred_fallthru
          _
        // Predicated region
        $region29: #{tpu_custom_call.1} parent=19 // pred_check
          %p294 = pneg %p159
        $region30: #{tpu_custom_call.1} parent=19 // pred_check_branch
          %296 = sbr.rel (%p294) target = $region32
        $region31: #{tpu_custom_call.1} parent=19 // pred_region
          %s297 = sand.u32 %s21, 1
          %s298 = scalar_lea.sflag [#allocation13], %s297
          %s299 = sand.u32 %s149, 1
          %s300 = smul.addr %s299, 8
          %s301 = scalar_lea.vmem [#allocation12], %s300
          %s303 = ssub.s32 128, 128
          %304 = vsyncadd %s298, %s303
          %s305 = sadd.s32 %s31, %s30
          %s306 = smul.addr %s28, 4
          %s307 = sadd.s32 %s305, %s306
          %s308 = smul.addr %s307, 128
          %s309 = scalar_lea.hbm %s3, %s308
          %s311 = sshll.u32 %s301, 4
          %s312 = int_to_ptr.vmem [resolvable:$true] %s311
          %314 = dma.hbm_to_vmem [thread:$0]  %s309, 128, %s312, %s298
        $region32: #{tpu_custom_call.1} parent=19 // pred_fallthru
          _
        // Predicated region
        $region33: #{tpu_custom_call.1} parent=19 // pred_check
          %p315 = pneg %p185
        $region34: #{tpu_custom_call.1} parent=19 // pred_check_branch
          %317 = sbr.rel (%p315) target = $region36
        $region35: #{tpu_custom_call.1} parent=19 // pred_region
          %s318 = sand.u32 %s21, 1
          %s319 = scalar_lea.sflag [#allocation13], %s318
          %s320 = sand.u32 %s175, 1
          %s321 = smul.addr %s320, 8
          %s322 = scalar_lea.vmem [#allocation14], %s321
          %s324 = ssub.s32 128, 128
          %325 = vsyncadd %s319, %s324
          %s326 = smul.addr %s30, 128
          %s327 = scalar_lea.hbm %s4, %s326
          %s329 = sshll.u32 %s322, 4
          %s330 = int_to_ptr.vmem [resolvable:$true] %s329
          %332 = dma.hbm_to_vmem [thread:$0]  %s327, 128, %s330, %s319
        $region36: #{tpu_custom_call.1} parent=19 // pred_fallthru
          _
      $region20: #{tpu_custom_call.1} parent=5 // pred_fallthru
        _
      %p333 = scmp.le.s32.totalorder 1, %s21
      %p334 = scmp.lt.s32.totalorder %s21, 9
      %p335 = pnand %p333, %p334
      %p336 = pneg %p335
      // Predicated region
      $region37: #{tpu_custom_call.1} parent=5 // pred_check
        _
      $region38: #{tpu_custom_call.1} parent=5 // pred_check_branch
        %338 = sbr.rel (%p335) target = $region40
      $region39: #{tpu_custom_call.1} parent=5 // pred_region
        %s339 = ssub.s32 %s21, 1
        // Predicated region
        $region41: #{tpu_custom_call.1} parent=39 // pred_check
          %p340 = pneg %p75
        $region42: #{tpu_custom_call.1} parent=39 // pred_check_branch
          %342 = sbr.rel (%p340) target = $region44
        $region43: #{tpu_custom_call.1} parent=39 // pred_region
          %343 = dma.done [#allocation7], 32
        $region44: #{tpu_custom_call.1} parent=39 // pred_fallthru
          _
        %s344 = sand.u32 %s26, 1
        %s345 = scalar_lea.sflag [#allocation10], %s344
        %s346 = sand.u32 %s92, 1
        %s347 = smul.addr %s346, 8
        %s348 = scalar_lea.vmem [#allocation9], %s347
        // Predicated region
        $region45: #{tpu_custom_call.1} parent=39 // pred_check
          %p349 = pneg %p105
        $region46: #{tpu_custom_call.1} parent=39 // pred_check_branch
          %351 = sbr.rel (%p349) target = $region48
        $region47: #{tpu_custom_call.1} parent=39 // pred_region
          %352 = dma.done %s345, 128
        $region48: #{tpu_custom_call.1} parent=39 // pred_fallthru
          _
        %s353 = sand.u32 %s26, 1
        %s354 = scalar_lea.sflag [#allocation10], %s353
        %s355 = sand.u32 %s122, 1
        %s356 = smul.addr %s355, 8
        %s357 = scalar_lea.vmem [#allocation11], %s356
        // Predicated region
        $region49: #{tpu_custom_call.1} parent=39 // pred_check
          %p358 = pneg %p135
        $region50: #{tpu_custom_call.1} parent=39 // pred_check_branch
          %360 = sbr.rel (%p358) target = $region52
        $region51: #{tpu_custom_call.1} parent=39 // pred_region
          %361 = dma.done %s354, 128
        $region52: #{tpu_custom_call.1} parent=39 // pred_fallthru
          _
        %s362 = sand.u32 %s26, 1
        %s363 = scalar_lea.sflag [#allocation13], %s362
        %s364 = sand.u32 %s152, 1
        %s365 = smul.addr %s364, 8
        %s366 = scalar_lea.vmem [#allocation12], %s365
        // Predicated region
        $region53: #{tpu_custom_call.1} parent=39 // pred_check
          %p367 = pneg %p165
        $region54: #{tpu_custom_call.1} parent=39 // pred_check_branch
          %369 = sbr.rel (%p367) target = $region56
        $region55: #{tpu_custom_call.1} parent=39 // pred_region
          %370 = dma.done %s363, 128
        $region56: #{tpu_custom_call.1} parent=39 // pred_fallthru
          _
        %s371 = sand.u32 %s26, 1
        %s372 = scalar_lea.sflag [#allocation13], %s371
        %s373 = sand.u32 %s178, 1
        %s374 = smul.addr %s373, 8
        %s375 = scalar_lea.vmem [#allocation14], %s374
        // Predicated region
        $region57: #{tpu_custom_call.1} parent=39 // pred_check
          %p376 = pneg %p191
        $region58: #{tpu_custom_call.1} parent=39 // pred_check_branch
          %378 = sbr.rel (%p376) target = $region60
        $region59: #{tpu_custom_call.1} parent=39 // pred_region
          %379 = dma.done %s372, 128
        $region60: #{tpu_custom_call.1} parent=39 // pred_fallthru
          _
        %p380 = pneg %p75
        %p381 = pneg %p72
        %s382 = sand.u32 %s26, 1
        %s383 = scalar_lea.sflag [#allocation10], %s382
        %s384 = sand.u32 %s92, 1
        %s385 = smul.addr %s384, 8
        %s386 = scalar_lea.vmem [#allocation9], %s385
        %p387 = pneg %p105
        %p388 = pneg %p102
        %s389 = sand.u32 %s26, 1
        %s390 = scalar_lea.sflag [#allocation10], %s389
        %s391 = sand.u32 %s122, 1
        %s392 = smul.addr %s391, 8
        %s393 = scalar_lea.vmem [#allocation11], %s392
        %p394 = pneg %p135
        %p395 = pneg %p132
        %s396 = sand.u32 %s26, 1
        %s397 = scalar_lea.sflag [#allocation13], %s396
        %s398 = sand.u32 %s152, 1
        %s399 = smul.addr %s398, 8
        %s400 = scalar_lea.vmem [#allocation12], %s399
        %p401 = pneg %p165
        %p402 = pneg %p162
        %s403 = sand.u32 %s26, 1
        %s404 = scalar_lea.sflag [#allocation13], %s403
        %s405 = sand.u32 %s178, 1
        %s406 = smul.addr %s405, 8
        %s407 = scalar_lea.vmem [#allocation14], %s406
        %p408 = pneg %p191
        %p409 = pneg %p188
        %p410 = pneg %p219
        %p411 = pneg %p216
        %s412 = sand.u32 %s206, 1
        %s413 = scalar_lea.sflag [#allocation8], %s412
        %s414 = sand.u32 %s206, 1
        %s415 = smul.addr %s414, 8
        %s416 = scalar_lea.vmem [#allocation15], %s415
        %p419 = scmp.eq.s32.totalorder %s35, 0
        // Predicated region
        $region61: #{tpu_custom_call.1} parent=39 // pred_check
          %p420 = pneg %p419
        $region62: #{tpu_custom_call.1} parent=39 // pred_check_branch
          %422 = sbr.rel (%p420) target = $region64
        $region63: #{tpu_custom_call.1} parent=39 // pred_region
          %vm423 = vcmask 7168
          %424 = vst.msk [vmem:[#allocation2] sm:$0xff] %vm423, -inf
          %425 = vst.msk [vmem:[#allocation3] sm:$0xff] %vm423, 0.0
          %vm426 = vcmask 64512
          %427 = vst.msk [vmem:[#allocation4] sm:$0xff] %vm426, 0.0
        $region64: #{tpu_custom_call.1} parent=39 // pred_fallthru
          _
        %v428 = vld [vmem:[%s348] sm:$0xff]
        %v429 = vld [vmem:[%s357] sm:$0xff]
        %v430 = vld [vmem:[%s366] sm:$0xff]
        %vm431 = vcmask 64512
        %v433 = vsel %vm431, %v428, 0
        %v436 = vsel %vm431, %v429, 0
        %438 = vmatprep.subr.mxu0 0.0
        %439 = vmatpush1.xpose.msra.mxu0 %v436
        %440 = vmatprep.subr.mxu0 0.0
        %441 = vmatpush1.xpose.msra.mxu0 0.0
        %442 = vmatprep.subr.mxu0 0.0
        %443 = vmatpush1.xpose.msra.mxu0 0.0
        %444 = vmatprep.subr.mxu0 0.0
        %445 = vmatpush1.xpose.msra.mxu0 0.0
        %446 = vmatprep.subr.mxu0 0.0
        %447 = vmatpush1.xpose.msra.mxu0 0.0
        %448 = vmatprep.subr.mxu0 0.0
        %449 = vmatpush1.xpose.msra.mxu0 0.0
        %450 = vmatprep.subr.mxu0 0.0
        %451 = vmatpush1.xpose.msra.mxu0 0.0
        %452 = vmatprep.subr.mxu0 0.0
        %453 = vmatpush1.xpose.msra.mxu0 0.0
        %454 = vmatprep.subr.mxu0 0.0
        %455 = vmatpush1.xpose.msra.mxu0 0.0
        %456 = vmatprep.subr.mxu0 0.0
        %457 = vmatpush1.xpose.msra.mxu0 0.0
        %458 = vmatprep.subr.mxu0 0.0
        %459 = vmatpush1.xpose.msra.mxu0 0.0
        %460 = vmatprep.subr.mxu0 0.0
        %461 = vmatpush1.xpose.msra.mxu0 0.0
        %462 = vmatprep.subr.mxu0 0.0
        %463 = vmatpush1.xpose.msra.mxu0 0.0
        %464 = vmatprep.subr.mxu0 0.0
        %465 = vmatpush1.xpose.msra.mxu0 0.0
        %466 = vmatprep.subr.mxu0 0.0
        %467 = vmatpush1.xpose.msra.mxu0 0.0
        %468 = vmatprep.subr.mxu0 0.0
        %469 = vmatpush1.xpose.msra.mxu0 0.0
        %470 = vmatprep.subr.mxu0 0.0
        %471 = vmatpush1.xpose.msra.mxu0 0.0
        %472 = vmatprep.subr.mxu0 0.0
        %473 = vmatpush1.xpose.msra.mxu0 0.0
        %474 = vmatprep.subr.mxu0 0.0
        %475 = vmatpush1.xpose.msra.mxu0 0.0
        %476 = vmatprep.subr.mxu0 0.0
        %477 = vmatpush1.xpose.msra.mxu0 0.0
        %478 = vmatprep.subr.mxu0 0.0
        %479 = vmatpush1.xpose.msra.mxu0 0.0
        %480 = vmatprep.subr.mxu0 0.0
        %481 = vmatpush1.xpose.msra.mxu0 0.0
        %482 = vmatprep.subr.mxu0 0.0
        %483 = vmatpush1.xpose.msra.mxu0 0.0
        %484 = vmatprep.subr.mxu0 0.0
        %485 = vmatpush1.xpose.msra.mxu0 0.0
        %486 = vmatprep.subr.mxu0 0.0
        %487 = vmatpush1.xpose.msra.mxu0 0.0
        %488 = vmatprep.subr.mxu0 0.0
        %489 = vmatpush1.xpose.msra.mxu0 0.0
        %490 = vmatprep.subr.mxu0 0.0
        %491 = vmatpush1.xpose.msra.mxu0 0.0
        %492 = vmatprep.subr.mxu0 0.0
        %493 = vmatpush1.xpose.msra.mxu0 0.0
        %494 = vmatprep.subr.mxu0 0.0
        %495 = vmatpush1.xpose.msra.mxu0 0.0
        %496 = vmatprep.subr.mxu0 0.0
        %497 = vmatpush1.xpose.msra.mxu0 0.0
        %498 = vmatprep.subr.mxu0 0.0
        %499 = vmatpush1.xpose.msra.mxu0 0.0
        %500 = vmatprep.subr.mxu0 0.0
        %501 = vmatpush1.xpose.msra.mxu0 0.0
        %502 = vmatprep.mubr.f32.mxu0 0.0
        %503 = vmatmul.mubr.f32.gmra.mrb[0].mxu0 %v433
        %v504 = vpop.f32.mrb[0].mxu0
        %v505 = vadd.f32 0.0, %v504
        %v506 = vpop.f32.mrb[0].mxu0
        %507 = vdwg.mxu0
        %v508 = vld [vmem:[#allocation6] sm:$0x3]
        %vm509 = vnez %v508
        %v510 = vsel %vm509, 16843009, 0
        %v511 = vunpack.c.0.s8 %v510
        %vm512 = vcmp.ne.s32.totalorder %v511, 0
        %v513 = vsel %vm512, -1e+09, %v505
        %v514 = vld [vmem:[#allocation2] sm:$0xff]
        %v515 = vsel %vm431, %v513, -inf
        %516 = vmax.xlane.f32.xlu0 %v515
        %v517 = vpop.xlane.xlu0 %516
        %v518 = vmax.f32 %v514, %v517
        %v519 = vsub.f32 %v514, %v518
        %v520 = vmul.f32 %v519, 1.442695
        %v521 = vpow.pop %v520
        %523 = vset.pattern.permute.xlu0 0
        %524 = vperm.xlu0 %523, %v518
        %v525 = vpop.permute.xlu0 %524
        %v527 = vsub.f32 %v513, %v525
        %v528 = vmul.f32 %v527, 1.442695
        %v529 = vpow.pop %v528
        %v530 = vld [vmem:[#allocation3] sm:$0xff]
        %v531 = vmul.f32 %v521, %v530
        %v532 = vsel %vm431, %v529, 0.0
        %533 = vadd.xlane.f32.xlu0 %v532
        %v534 = vpop.xlane.xlu0 %533
        %v535 = vadd.f32 %v531, %v534
        %vm536 = vcmask 7168
        %537 = vst.msk [vmem:[#allocation3] sm:$0xff] %vm536, %v535
        %v538 = vld [vmem:[#allocation4] sm:$0xff]
        %540 = vset.pattern.permute.xlu0 0
        %541 = vperm.xlu0 %540, %v521
        %v542 = vpop.permute.xlu0 %541
        %v544 = vmul.f32 %v542, %v538
        %v546 = vsel %vm431, %v529, 0
        %548 = vmatprep.subr.mxu0 0.0
        %549 = vmatpush1.msra.mxu0 %v430
        %550 = vmatprep.subr.mxu0 0.0
        %551 = vmatpush1.msra.mxu0 0.0
        %552 = vmatprep.subr.mxu0 0.0
        %553 = vmatpush1.msra.mxu0 0.0
        %554 = vmatprep.subr.mxu0 0.0
        %555 = vmatpush1.msra.mxu0 0.0
        %556 = vmatprep.subr.mxu0 0.0
        %557 = vmatpush1.msra.mxu0 0.0
        %558 = vmatprep.subr.mxu0 0.0
        %559 = vmatpush1.msra.mxu0 0.0
        %560 = vmatprep.subr.mxu0 0.0
        %561 = vmatpush1.msra.mxu0 0.0
        %562 = vmatprep.subr.mxu0 0.0
        %563 = vmatpush1.msra.mxu0 0.0
        %564 = vmatprep.subr.mxu0 0.0
        %565 = vmatpush1.msra.mxu0 0.0
        %566 = vmatprep.subr.mxu0 0.0
        %567 = vmatpush1.msra.mxu0 0.0
        %568 = vmatprep.subr.mxu0 0.0
        %569 = vmatpush1.msra.mxu0 0.0
        %570 = vmatprep.subr.mxu0 0.0
        %571 = vmatpush1.msra.mxu0 0.0
        %572 = vmatprep.subr.mxu0 0.0
        %573 = vmatpush1.msra.mxu0 0.0
        %574 = vmatprep.subr.mxu0 0.0
        %575 = vmatpush1.msra.mxu0 0.0
        %576 = vmatprep.subr.mxu0 0.0
        %577 = vmatpush1.msra.mxu0 0.0
        %578 = vmatprep.subr.mxu0 0.0
        %579 = vmatpush1.msra.mxu0 0.0
        %580 = vmatprep.subr.mxu0 0.0
        %581 = vmatpush1.msra.mxu0 0.0
        %582 = vmatprep.subr.mxu0 0.0
        %583 = vmatpush1.msra.mxu0 0.0
        %584 = vmatprep.subr.mxu0 0.0
        %585 = vmatpush1.msra.mxu0 0.0
        %586 = vmatprep.subr.mxu0 0.0
        %587 = vmatpush1.msra.mxu0 0.0
        %588 = vmatprep.subr.mxu0 0.0
        %589 = vmatpush1.msra.mxu0 0.0
        %590 = vmatprep.subr.mxu0 0.0
        %591 = vmatpush1.msra.mxu0 0.0
        %592 = vmatprep.subr.mxu0 0.0
        %593 = vmatpush1.msra.mxu0 0.0
        %594 = vmatprep.subr.mxu0 0.0
        %595 = vmatpush1.msra.mxu0 0.0
        %596 = vmatprep.subr.mxu0 0.0
        %597 = vmatpush1.msra.mxu0 0.0
        %598 = vmatprep.subr.mxu0 0.0
        %599 = vmatpush1.msra.mxu0 0.0
        %600 = vmatprep.subr.mxu0 0.0
        %601 = vmatpush1.msra.mxu0 0.0
        %602 = vmatprep.subr.mxu0 0.0
        %603 = vmatpush1.msra.mxu0 0.0
        %604 = vmatprep.subr.mxu0 0.0
        %605 = vmatpush1.msra.mxu0 0.0
        %606 = vmatprep.subr.mxu0 0.0
        %607 = vmatpush1.msra.mxu0 0.0
        %608 = vmatprep.subr.mxu0 0.0
        %609 = vmatpush1.msra.mxu0 0.0
        %610 = vmatprep.subr.mxu0 0.0
        %611 = vmatpush1.msra.mxu0 0.0
        %612 = vmatprep.mubr.f32.mxu0 0.0
        %613 = vmatmul.mubr.f32.gmra.mrb[0].mxu0 %v546
        %v614 = vpop.f32.mrb[0].mxu0
        %v615 = vadd.f32 0.0, %v614
        %v616 = vpop.f32.mrb[0].mxu0
        %617 = vdwg.mxu0
        %v618 = vadd.f32 %v544, %v615
        %619 = vst.msk [vmem:[#allocation4] sm:$0xff] %vm431, %v618
        %620 = vst.msk [vmem:[#allocation2] sm:$0xff] %vm536, %v518
        // Predicated region
        $region65: #{tpu_custom_call.1} parent=39 // pred_check
          %p621 = pneg %p419
        $region66: #{tpu_custom_call.1} parent=39 // pred_check_branch
          %623 = sbr.rel (%p621) target = $region68
        $region67: #{tpu_custom_call.1} parent=39 // pred_region
          %v624 = vld [vmem:[#allocation4] sm:$0xff]
          %v625 = vld [vmem:[#allocation3] sm:$0xff]
          %v626 = vrcp.pop %v625
          %628 = vset.pattern.permute.xlu0 0
          %629 = vperm.xlu0 %628, %v626
          %v630 = vpop.permute.xlu0 %629
          %v632 = vmul.f32 %v624, %v630
          %v633 = vld [vmem:[%s375] sm:$0xff]
          %v635 = vsel %vm431, %v632, 0
          %637 = vmatprep.subr.mxu0 0.0
          %638 = vmatpush1.msra.mxu0 %v633
          %639 = vmatprep.subr.mxu0 0.0
          %640 = vmatpush1.msra.mxu0 0.0
          %641 = vmatprep.subr.mxu0 0.0
          %642 = vmatpush1.msra.mxu0 0.0
          %643 = vmatprep.subr.mxu0 0.0
          %644 = vmatpush1.msra.mxu0 0.0
          %645 = vmatprep.subr.mxu0 0.0
          %646 = vmatpush1.msra.mxu0 0.0
          %647 = vmatprep.subr.mxu0 0.0
          %648 = vmatpush1.msra.mxu0 0.0
          %649 = vmatprep.subr.mxu0 0.0
          %650 = vmatpush1.msra.mxu0 0.0
          %651 = vmatprep.subr.mxu0 0.0
          %652 = vmatpush1.msra.mxu0 0.0
          %653 = vmatprep.subr.mxu0 0.0
          %654 = vmatpush1.msra.mxu0 0.0
          %655 = vmatprep.subr.mxu0 0.0
          %656 = vmatpush1.msra.mxu0 0.0
          %657 = vmatprep.subr.mxu0 0.0
          %658 = vmatpush1.msra.mxu0 0.0
          %659 = vmatprep.subr.mxu0 0.0
          %660 = vmatpush1.msra.mxu0 0.0
          %661 = vmatprep.subr.mxu0 0.0
          %662 = vmatpush1.msra.mxu0 0.0
          %663 = vmatprep.subr.mxu0 0.0
          %664 = vmatpush1.msra.mxu0 0.0
          %665 = vmatprep.subr.mxu0 0.0
          %666 = vmatpush1.msra.mxu0 0.0
          %667 = vmatprep.subr.mxu0 0.0
          %668 = vmatpush1.msra.mxu0 0.0
          %669 = vmatprep.subr.mxu0 0.0
          %670 = vmatpush1.msra.mxu0 0.0
          %671 = vmatprep.subr.mxu0 0.0
          %672 = vmatpush1.msra.mxu0 0.0
          %673 = vmatprep.subr.mxu0 0.0
          %674 = vmatpush1.msra.mxu0 0.0
          %675 = vmatprep.subr.mxu0 0.0
          %676 = vmatpush1.msra.mxu0 0.0
          %677 = vmatprep.subr.mxu0 0.0
          %678 = vmatpush1.msra.mxu0 0.0
          %679 = vmatprep.subr.mxu0 0.0
          %680 = vmatpush1.msra.mxu0 0.0
          %681 = vmatprep.subr.mxu0 0.0
          %682 = vmatpush1.msra.mxu0 0.0
          %683 = vmatprep.subr.mxu0 0.0
          %684 = vmatpush1.msra.mxu0 0.0
          %685 = vmatprep.subr.mxu0 0.0
          %686 = vmatpush1.msra.mxu0 0.0
          %687 = vmatprep.subr.mxu0 0.0
          %688 = vmatpush1.msra.mxu0 0.0
          %689 = vmatprep.subr.mxu0 0.0
          %690 = vmatpush1.msra.mxu0 0.0
          %691 = vmatprep.subr.mxu0 0.0
          %692 = vmatpush1.msra.mxu0 0.0
          %693 = vmatprep.subr.mxu0 0.0
          %694 = vmatpush1.msra.mxu0 0.0
          %695 = vmatprep.subr.mxu0 0.0
          %696 = vmatpush1.msra.mxu0 0.0
          %697 = vmatprep.subr.mxu0 0.0
          %698 = vmatpush1.msra.mxu0 0.0
          %699 = vmatprep.subr.mxu0 0.0
          %700 = vmatpush1.msra.mxu0 0.0
          %701 = vmatprep.mubr.f32.mxu0 0.0
          %702 = vmatmul.mubr.f32.gmra.mrb[0].mxu0 %v635
          %v703 = vpop.f32.mrb[0].mxu0
          %v704 = vadd.f32 0.0, %v703
          %v705 = vpop.f32.mrb[0].mxu0
          %706 = vdwg.mxu0
          %p707 = scmp.eq.s32.totalorder %s34, 0
          // Predicated region
          $region69: #{tpu_custom_call.1} parent=67 // pred_check
            %p708 = pneg %p707
          $region70: #{tpu_custom_call.1} parent=67 // pred_check_branch
            %710 = sbr.rel (%p708) target = $region72
          $region71: #{tpu_custom_call.1} parent=67 // pred_region
            %vm711 = vcmask 261120
            %712 = vst.msk [vmem:[#allocation5] sm:$0xff] %vm711, %v704
          $region72: #{tpu_custom_call.1} parent=67 // pred_fallthru
            _
          %p713 = scmp.gt.s32.totalorder %s34, 0
          // Predicated region
          $region73: #{tpu_custom_call.1} parent=67 // pred_check
            %p714 = pneg %p713
          $region74: #{tpu_custom_call.1} parent=67 // pred_check_branch
            %716 = sbr.rel (%p714) target = $region76
          $region75: #{tpu_custom_call.1} parent=67 // pred_region
            %v717 = vld [vmem:[#allocation5] sm:$0xff]
            %v718 = vadd.f32 %v717, %v704
            %vm719 = vcmask 261120
            %720 = vst.msk [vmem:[#allocation5] sm:$0xff] %vm719, %v718
          $region76: #{tpu_custom_call.1} parent=67 // pred_fallthru
            _
          %p721 = scmp.eq.s32.totalorder %s34, 3
          // Predicated region
          $region77: #{tpu_custom_call.1} parent=67 // pred_check
            %p722 = pneg %p721
          $region78: #{tpu_custom_call.1} parent=67 // pred_check_branch
            %724 = sbr.rel (%p722) target = $region80
          $region79: #{tpu_custom_call.1} parent=67 // pred_region
            %v725 = vld [vmem:[#allocation5] sm:$0xff]
            %vm726 = vcmask 261120
            %727 = vst.msk [vmem:[%s416] sm:$0xff] %vm726, %v725
          $region80: #{tpu_custom_call.1} parent=67 // pred_fallthru
            _
        $region68: #{tpu_custom_call.1} parent=39 // pred_fallthru
          _
        %s728 = sand.u32 %s206, 1
        %s729 = scalar_lea.sflag [#allocation8], %s728
        %s730 = sand.u32 %s206, 1
        %s731 = smul.addr %s730, 8
        %s732 = scalar_lea.vmem [#allocation15], %s731
        // Predicated region
        $region81: #{tpu_custom_call.1} parent=39 // pred_check
          %p733 = pneg %p216
        $region82: #{tpu_custom_call.1} parent=39 // pred_check_branch
          %735 = sbr.rel (%p733) target = $region84
        $region83: #{tpu_custom_call.1} parent=39 // pred_region
          %s737 = ssub.s32 128, 128
          %738 = vsyncadd %s729, %s737
          %s739 = sadd.s32 %s33, %s32
          %s740 = smul.addr %s739, 128
          %s741 = scalar_lea.hbm %s5, %s740
          %s743 = sshll.u32 %s732, 4
          %s744 = int_to_ptr.vmem [resolvable:$true] %s743
          %746 = dma.vmem_to_hbm [thread:$0]  %s744, 128, %s741, %s729
        $region84: #{tpu_custom_call.1} parent=39 // pred_fallthru
          _
      $region40: #{tpu_custom_call.1} parent=5 // pred_fallthru
        _
      %p747 = scmp.le.s32.totalorder 2, %s21
      // Predicated region
      $region85: #{tpu_custom_call.1} parent=5 // pred_check
        %p748 = pneg %p747
      $region86: #{tpu_custom_call.1} parent=5 // pred_check_branch
        %750 = sbr.rel (%p748) target = $region88
      $region87: #{tpu_custom_call.1} parent=5 // pred_region
        %s751 = ssub.s32 %s21, 2
        // Predicated region
        $region89: #{tpu_custom_call.1} parent=87 // pred_check
          %p752 = pneg %p222
        $region90: #{tpu_custom_call.1} parent=87 // pred_check_branch
          %754 = sbr.rel (%p752) target = $region92
        $region91: #{tpu_custom_call.1} parent=87 // pred_region
          %s755 = sand.u32 %s207, 1
          %s756 = scalar_lea.sflag [#allocation8], %s755
          %s757 = sand.u32 %s207, 1
          %s758 = smul.addr %s757, 8
          %s759 = scalar_lea.vmem [#allocation15], %s758
          %760 = dma.done %s756, 128
        $region92: #{tpu_custom_call.1} parent=87 // pred_fallthru
          _
      $region88: #{tpu_custom_call.1} parent=5 // pred_fallthru
        _
    $region6: #{tpu_custom_call.1} parent=1 // loop_footer
      %s25 = sadd.s32 1, %s21
    $region7: #{tpu_custom_call.1} parent=1 // loop_footer_branch
      %20 = sbr.rel target = $region3
    $region8: #{tpu_custom_call.1} parent=1 // loop_exit
      _
    %761 = vsyncpa [#allocation7], 1
    %s762 = scalar_lea.sflag [#allocation7], 1
    %763 = vsyncpa %s762, 1
    %764 = vsyncpa [#allocation10], 1
    %s765 = scalar_lea.sflag [#allocation10], 1
    %766 = vsyncpa %s765, 1
    %767 = vsyncpa [#allocation13], 1
    %s768 = scalar_lea.sflag [#allocation13], 1
    %769 = vsyncpa %s768, 1
    %770 = vsyncpa [#allocation8], 1
    %s771 = scalar_lea.sflag [#allocation8], 1
    %772 = vsyncpa %s771, 1

</llo_original>
